<compile_context>
chip_gen: v7x
topology: tpu7x:2x2x1
jax: 0.10.0
libtpu: 0.0.40
codegen_flags: <defaults>
</compile_context>

<pallas_src>
import functools

import jax
import jax.numpy as jnp
from jax.experimental import pallas as pl
from jax.experimental.pallas import tpu as pltpu


def _round_up(x, m):
    return ((x + m - 1) // m) * m


def _pick_tile(n, preferred):
    for t in preferred:
        if n % t == 0:
            return t
    return n


def _linear_relu_kernel(x_ref, w_ref, b_ref, h_ref):
    # (TM, Din) @ (Din, Dout) on the MXU, f32 accumulation.
    acc = jnp.dot(x_ref[...], w_ref[...], preferred_element_type=jnp.float32)
    acc = acc + b_ref[...]           # bias kept in f32, broadcast over node rows
    acc = jnp.maximum(acc, 0.0)      # activation = ReLU (module takes it as kwarg)
    # TODO(synk): dropout(p=0.5) is stochastic; eval-mode identity is used here.
    h_ref[...] = acc.astype(h_ref.dtype)


def _aggregate_kernel(adj_ref, h_ref, o_ref, acc_ref):
    k = pl.program_id(1)

    @pl.when(k == 0)
    def _():
        acc_ref[...] = jnp.zeros_like(acc_ref)

    # Row-normalized adjacency tile @ cached-h tile == partial neighbor mean.
    acc_ref[...] += jnp.dot(adj_ref[...], h_ref[...],
                            preferred_element_type=jnp.float32)

    @pl.when(k == pl.num_programs(1) - 1)
    def _():
        o_ref[...] = acc_ref[...].astype(o_ref.dtype)


@functools.partial(jax.jit, static_argnames=("compute_dtype",))
def graph_convolution(adj_norm, feats, weight, bias, *, compute_dtype=jnp.bfloat16):
    """adj_norm: (N, N) f32, feats: (N, dim_in), weight: (dim_in, dim_out), bias: (1, dim_out).

    Note: if exact mean semantics at very high node degree matter, call with
    compute_dtype=jnp.float32 (bf16 rounds 1/deg).
    """
    n, dim_in = feats.shape
    dim_out = weight.shape[1]
    isz = jnp.dtype(compute_dtype).itemsize

    # Lane-dense padding (multiples of 128 on every lane axis).
    n_pad = _round_up(n, 128)
    din_pad = _round_up(dim_in, 128)
    dout_pad = _round_up(dim_out, 128)

    x = jnp.pad(feats, ((0, n_pad - n), (0, din_pad - dim_in))).astype(compute_dtype)
    w = jnp.pad(weight, ((0, din_pad - dim_in), (0, dout_pad - dim_out))).astype(compute_dtype)
    b = jnp.pad(bias, ((0, 0), (0, dout_pad - dim_out))).astype(jnp.float32)
    a = jnp.pad(adj_norm, ((0, n_pad - n), (0, n_pad - n))).astype(compute_dtype)

    # ---- Kernel 1: h = relu(x @ W + b), computed exactly once over row tiles ----
    tm_lin = _pick_tile(n_pad, (512, 256, 128))
    h = pl.pallas_call(
        _linear_relu_kernel,
        out_shape=jax.ShapeDtypeStruct((n_pad, dout_pad), compute_dtype),
        grid_spec=pltpu.PrefetchScalarGridSpec(
            num_scalar_prefetch=0,
            grid=(n_pad // tm_lin,),
            in_specs=[
                pl.BlockSpec((tm_lin, din_pad), lambda i: (i, 0)),
                pl.BlockSpec((din_pad, dout_pad), lambda i: (0, 0)),
                pl.BlockSpec((1, dout_pad), lambda i: (0, 0)),
            ],
            out_specs=pl.BlockSpec((tm_lin, dout_pad), lambda i: (i, 0)),
        ),
        compiler_params=pltpu.CompilerParams(
            dimension_semantics=("parallel",),
            vmem_limit_bytes=48 * 1024 * 1024,
        ),
        cost_estimate=pl.CostEstimate(
            flops=2 * n_pad * din_pad * dout_pad,
            transcendentals=0,
            bytes_accessed=(n_pad * din_pad + din_pad * dout_pad) * isz
            + dout_pad * 4 + n_pad * dout_pad * isz,
        ),
    )(x, w, b)

    # ---- Kernel 2: out = A_norm @ h (tiled k-reduction with VMEM accumulator) ----
    tm = _pick_tile(n_pad, (256, 128))
    tk = _pick_tile(n_pad, (512, 256, 128))
    out = pl.pallas_call(
        _aggregate_kernel,
        out_shape=jax.ShapeDtypeStruct((n_pad, dout_pad), jnp.float32),
        grid_spec=pltpu.PrefetchScalarGridSpec(
            num_scalar_prefetch=0,
            grid=(n_pad // tm, n_pad // tk),
            in_specs=[
                pl.BlockSpec((tm, tk), lambda i, k: (i, k)),
                pl.BlockSpec((tk, dout_pad), lambda i, k: (k, 0)),
            ],
            out_specs=pl.BlockSpec((tm, dout_pad), lambda i, k: (i, 0)),
            scratch_shapes=[pltpu.VMEM((tm, dout_pad), jnp.float32)],
        ),
        compiler_params=pltpu.CompilerParams(
            dimension_semantics=("parallel", "arbitrary"),
            vmem_limit_bytes=48 * 1024 * 1024,
        ),
        cost_estimate=pl.CostEstimate(
            flops=2 * n_pad * n_pad * dout_pad,
            transcendentals=0,
            bytes_accessed=n_pad * n_pad * isz
            + n_pad * dout_pad * isz + n_pad * dout_pad * 4,
        ),
    )(a, h)

    return out[:n, :dim_out]


def build_normalized_adjacency(edge_dict, n):
    """Dense row-normalized adjacency: A[i, j] = 1/len(edge_dict[i]) for j in edge_dict[i]."""
    a = jnp.zeros((n, n), dtype=jnp.float32)
    for i in range(n):
        nbrs = list(edge_dict[i])
        if not nbrs:
            # Isolated node: mean over an empty set is undefined; leave row zero.
            continue
        a = a.at[i, jnp.array(nbrs)].set(1.0 / len(nbrs))
    return a


if __name__ == "__main__":
    # Small deterministic problem: N=16 nodes, dim_in=32, dim_out=64.
    N, DIM_IN, DIM_OUT = 16, 32, 64
    key = jax.random.PRNGKey(0)
    k_feat, k_w, k_b = jax.random.split(key, 3)

    feats = jax.random.normal(k_feat, (N, DIM_IN), dtype=jnp.float32)

    # nn.Linear-style init: U(-1/sqrt(dim_in), 1/sqrt(dim_in)); weight stored as (dim_in, dim_out).
    bound = 1.0 / (DIM_IN ** 0.5)
    weight = jax.random.uniform(k_w, (DIM_IN, DIM_OUT), jnp.float32, -bound, bound)
    bias = jax.random.uniform(k_b, (1, DIM_OUT), jnp.float32, -bound, bound)

    # Deterministic edge_dict: each node connects to itself and the next two nodes (ring).
    edge_dict = {i: [i, (i + 1) % N, (i + 2) % N] for i in range(N)}
    adj_norm = build_normalized_adjacency(edge_dict, N)

    # Pure-JAX reference (mirrors the torch forward in eval mode).
    h_ref = jnp.maximum(feats @ weight + bias, 0.0)
    ref = jnp.stack([jnp.mean(h_ref[jnp.array(edge_dict[i])], axis=0) for i in range(N)])

    # Exact-parity path (f32 compute).
    out_f32 = jax.block_until_ready(
        graph_convolution(adj_norm, feats, weight, bias, compute_dtype=jnp.float32))
    assert out_f32.shape == (N, DIM_OUT)
    assert jnp.allclose(out_f32, ref, atol=1e-4, rtol=1e-4), "f32 mismatch vs reference"

    # Fast path (bf16 inputs, f32 accumulation) — relaxed tolerance for bf16 rounding.
    out_bf16 = jax.block_until_ready(
        graph_convolution(adj_norm, feats, weight, bias, compute_dtype=jnp.bfloat16))
    assert out_bf16.shape == (N, DIM_OUT)
    assert jnp.allclose(out_bf16, ref, atol=5e-2, rtol=5e-2), "bf16 mismatch vs reference"

    print("KERNEL_OK")
</pallas_src>

<mosaic_0001>
module attributes {stable_mosaic.version = 11 : i64} {
  func.func @_linear_relu_kernel(%arg0: i32, %arg1: memref<128x128xf32, #tpu.memory_space<vmem>>, %arg2: memref<128x128xf32, #tpu.memory_space<vmem>>, %arg3: memref<1x128xf32, #tpu.memory_space<vmem>>, %arg4: memref<128x128xf32, #tpu.memory_space<vmem>>) attributes {dimension_semantics = [#tpu.dimension_semantics<parallel>], iteration_bounds = array<i64: 1>, scalar_prefetch = 0 : i64, scratch_operands = 0 : i64, tpu.core_type = #tpu.core_type<tc>, window_params = [{transform_indices = @transform_0, window_bounds = array<i64: 128, 128>}, {pipeline_mode = #tpu.pipeline_mode<synchronous>, transform_indices = @transform_1, window_bounds = array<i64: 128, 128>}, {pipeline_mode = #tpu.pipeline_mode<synchronous>, transform_indices = @transform_2, window_bounds = array<i64: 1, 128>}, {transform_indices = @transform_3, window_bounds = array<i64: 128, 128>}]} {
    %c0 = arith.constant 0 : index
    %c0_0 = arith.constant 0 : index
    %0 = vector.load %arg1[%c0, %c0_0] : memref<128x128xf32, #tpu.memory_space<vmem>>, vector<128x128xf32>
    %c0_1 = arith.constant 0 : index
    %c0_2 = arith.constant 0 : index
    %1 = vector.load %arg2[%c0_1, %c0_2] : memref<128x128xf32, #tpu.memory_space<vmem>>, vector<128x128xf32>
    %cst = arith.constant dense<0.000000e+00> : vector<128x128xf32>
    %2 = tpu.matmul %0, %1, %cst {dimension_numbers = #tpu.dot_dimension_numbers<[1], [0], [0], [1], [0, 0, 1, 1], [], []>} : vector<128x128xf32>, vector<128x128xf32>, vector<128x128xf32> -> vector<128x128xf32>
    %c0_3 = arith.constant 0 : index
    %c0_4 = arith.constant 0 : index
    %3 = vector.load %arg3[%c0_3, %c0_4] : memref<1x128xf32, #tpu.memory_space<vmem>>, vector<1x128xf32>
    %4 = vector.broadcast %3 : vector<1x128xf32> to vector<128x128xf32>
    %5 = arith.addf %2, %4 : vector<128x128xf32>
    %cst_5 = arith.constant 0.000000e+00 : f32
    %6 = vector.broadcast %cst_5 : f32 to vector<128x128xf32>
    %7 = arith.maximumf %5, %6 : vector<128x128xf32>
    %c0_6 = arith.constant 0 : index
    %c0_7 = arith.constant 0 : index
    %8 = vector.load %arg4[%c0_6, %c0_7] : memref<128x128xf32, #tpu.memory_space<vmem>>, vector<128x128xf32>
    tpu.vector_store %arg4[%c0_6, %c0_7], %7 {strides = array<i32>} : memref<128x128xf32, #tpu.memory_space<vmem>>, vector<128x128xf32>,
    return
  }
  func.func @transform_0(%arg0: i32) -> (i32, i32) {
    %c0_i32 = arith.constant 0 : i32
    %c0_i32_0 = arith.constant 0 : i32
    return %arg0, %c0_i32 : i32, i32
  }
  func.func @transform_1(%arg0: i32) -> (i32, i32) {
    %c0_i32 = arith.constant 0 : i32
    %c0_i32_0 = arith.constant 0 : i32
    %c0_i32_1 = arith.constant 0 : i32
    return %c0_i32, %c0_i32_0 : i32, i32
  }
  func.func @transform_2(%arg0: i32) -> (i32, i32) {
    %c0_i32 = arith.constant 0 : i32
    %c0_i32_0 = arith.constant 0 : i32
    %c0_i32_1 = arith.constant 0 : i32
    return %c0_i32, %c0_i32_0 : i32, i32
  }
  func.func @transform_3(%arg0: i32) -> (i32, i32) {
    %c0_i32 = arith.constant 0 : i32
    %c0_i32_0 = arith.constant 0 : i32
    return %arg0, %c0_i32 : i32, i32
  }
}

module attributes {stable_mosaic.version = 11 : i64} {
  func.func @_aggregate_kernel(%arg0: i32, %arg1: i32, %arg2: memref<128x128xf32, #tpu.memory_space<vmem>>, %arg3: memref<128x128xf32, #tpu.memory_space<vmem>>, %arg4: memref<128x128xf32, #tpu.memory_space<vmem>>, %arg5: memref<128x128xf32, #tpu.memory_space<vmem>>) attributes {dimension_semantics = [#tpu.dimension_semantics<parallel>, #tpu.dimension_semantics<arbitrary>], iteration_bounds = array<i64: 1, 1>, scalar_prefetch = 0 : i64, scratch_operands = 1 : i64, tpu.core_type = #tpu.core_type<tc>, window_params = [{transform_indices = @transform_0, window_bounds = array<i64: 128, 128>}, {transform_indices = @transform_1, window_bounds = array<i64: 128, 128>}, {transform_indices = @transform_2, window_bounds = array<i64: 128, 128>}]} {
    %c0_i32 = arith.constant 0 : i32
    %0 = arith.cmpi eq, %arg1, %c0_i32 : i32
    %1 = arith.extui %0 : i1 to i32
    %c0_i32_0 = arith.constant 0 : i32
    %2 = arith.cmpi ne, %1, %c0_i32_0 : i32
    scf.if %2 {
      %cst_10 = arith.constant 0.000000e+00 : f32
      %12 = vector.broadcast %cst_10 : f32 to vector<128x128xf32>
      %c0_11 = arith.constant 0 : index
      %c0_12 = arith.constant 0 : index
      %13 = vector.load %arg5[%c0_11, %c0_12] : memref<128x128xf32, #tpu.memory_space<vmem>>, vector<128x128xf32>
      tpu.vector_store %arg5[%c0_11, %c0_12], %12 {strides = array<i32>} : memref<128x128xf32, #tpu.memory_space<vmem>>, vector<128x128xf32>,
    } else {
    }
    %c0 = arith.constant 0 : index
    %c0_1 = arith.constant 0 : index
    %3 = vector.load %arg5[%c0, %c0_1] : memref<128x128xf32, #tpu.memory_space<vmem>>, vector<128x128xf32>
    %c0_2 = arith.constant 0 : index
    %c0_3 = arith.constant 0 : index
    %4 = vector.load %arg2[%c0_2, %c0_3] : memref<128x128xf32, #tpu.memory_space<vmem>>, vector<128x128xf32>
    %c0_4 = arith.constant 0 : index
    %c0_5 = arith.constant 0 : index
    %5 = vector.load %arg3[%c0_4, %c0_5] : memref<128x128xf32, #tpu.memory_space<vmem>>, vector<128x128xf32>
    %cst = arith.constant dense<0.000000e+00> : vector<128x128xf32>
    %6 = tpu.matmul %4, %5, %cst {dimension_numbers = #tpu.dot_dimension_numbers<[1], [0], [0], [1], [0, 0, 1, 1], [], []>} : vector<128x128xf32>, vector<128x128xf32>, vector<128x128xf32> -> vector<128x128xf32>
    %7 = arith.addf %3, %6 : vector<128x128xf32>
    %c0_6 = arith.constant 0 : index
    %c0_7 = arith.constant 0 : index
    %8 = vector.load %arg5[%c0_6, %c0_7] : memref<128x128xf32, #tpu.memory_space<vmem>>, vector<128x128xf32>
    tpu.vector_store %arg5[%c0_6, %c0_7], %7 {strides = array<i32>} : memref<128x128xf32, #tpu.memory_space<vmem>>, vector<128x128xf32>,
    %c0_i32_8 = arith.constant 0 : i32
    %9 = arith.cmpi eq, %arg1, %c0_i32_8 : i32
    %10 = arith.extui %9 : i1 to i32
    %c0_i32_9 = arith.constant 0 : i32
    %11 = arith.cmpi ne, %10, %c0_i32_9 : i32
    scf.if %11 {
      %c0_10 = arith.constant 0 : index
      %c0_11 = arith.constant 0 : index
      %12 = vector.load %arg5[%c0_10, %c0_11] : memref<128x128xf32, #tpu.memory_space<vmem>>, vector<128x128xf32>
      %c0_12 = arith.constant 0 : index
      %c0_13 = arith.constant 0 : index
      %13 = vector.load %arg4[%c0_12, %c0_13] : memref<128x128xf32, #tpu.memory_space<vmem>>, vector<128x128xf32>
      tpu.vector_store %arg4[%c0_12, %c0_13], %12 {strides = array<i32>} : memref<128x128xf32, #tpu.memory_space<vmem>>, vector<128x128xf32>,
    } else {
    }
    return
  }
  func.func @transform_0(%arg0: i32, %arg1: i32) -> (i32, i32) {
    %c0_i32 = arith.constant 0 : i32
    return %arg0, %arg1 : i32, i32
  }
  func.func @transform_1(%arg0: i32, %arg1: i32) -> (i32, i32) {
    %c0_i32 = arith.constant 0 : i32
    %c0_i32_0 = arith.constant 0 : i32
    return %arg1, %c0_i32 : i32, i32
  }
  func.func @transform_2(%arg0: i32, %arg1: i32) -> (i32, i32) {
    %c0_i32 = arith.constant 0 : i32
    %c0_i32_0 = arith.constant 0 : i32
    return %arg0, %c0_i32 : i32, i32
  }
}

</mosaic_0001>

<llo_original>
// kernel: graph_convolution.2
$region0: #{graph_convolution.2}
  #allocation0 [shape = 'u32[]', space=smem, size = 0x4, offset = 0x4, fixed_abs, tag = 'smem constant byte address 0x4 - core index']
  #allocation1 [shape = 'u32[144,128]{1,0:T(1,128)}', space=vmem, size = 0x12000, scoped, tag = 'internal scratch']
  %s0 = inlined_call_operand.vmem [shape: f32[128,128], index: 0, kind: input, shape index: {}]
  %s1 = inlined_call_operand.vmem [shape: f32[128,128], index: 1, kind: input, shape index: {}]
  %s2 = inlined_call_operand.vmem [shape: f32[1,128], index: 2, kind: input, shape index: {}]
  %s3 = inlined_call_operand.vmem [shape: f32[128,128], index: 3, kind: output, shape index: {}]
  %s4 = sld [smem:[#allocation0]]
  $region22: #{graph_convolution.2} parent=0
    _
  %s6 = ssub.s32 1, %s4
  %s7 = scalar_select 0, %s6, %s4
  // Predicated region
  $region2: #{graph_convolution.2} parent=0 // pred_check
    _
  $region3: #{graph_convolution.2} parent=0 // pred_check_branch
    %9 = sbr.rel (0) target = $region5
  $region4: #{graph_convolution.2} parent=0 // pred_region
    _
  $region5: #{graph_convolution.2} parent=0 // pred_fallthru
    _
  // Predicated region
  $region6: #{graph_convolution.2} parent=0 // pred_check
    _
  $region7: #{graph_convolution.2} parent=0 // pred_check_branch
    %11 = sbr.rel (0) target = $region9
  $region8: #{graph_convolution.2} parent=0 // pred_region
    _
  $region9: #{graph_convolution.2} parent=0 // pred_fallthru
    _
  // Predicated region
  $region10: #{graph_convolution.2} parent=0 // pred_check
    _
  $region11: #{graph_convolution.2} parent=0 // pred_check_branch
    %13 = sbr.rel (0) target = $region13
  $region12: #{graph_convolution.2} parent=0 // pred_region
    _
  $region13: #{graph_convolution.2} parent=0 // pred_fallthru
    _
  %v14 = vld [vmem:[%s0] sm:$0xff]
  %v15 = vld [vmem:[%s0 + $0x8] sm:$0xff]
  %v16 = vld [vmem:[%s0 + $0x10] sm:$0xff]
  %v17 = vld [vmem:[%s0 + $0x18] sm:$0xff]
  %v18 = vld [vmem:[%s0 + $0x20] sm:$0xff]
  %v19 = vld [vmem:[%s0 + $0x28] sm:$0xff]
  %v20 = vld [vmem:[%s0 + $0x30] sm:$0xff]
  %v21 = vld [vmem:[%s0 + $0x38] sm:$0xff]
  %v22 = vld [vmem:[%s0 + $0x40] sm:$0xff]
  %v23 = vld [vmem:[%s0 + $0x48] sm:$0xff]
  %v24 = vld [vmem:[%s0 + $0x50] sm:$0xff]
  %v25 = vld [vmem:[%s0 + $0x58] sm:$0xff]
  %v26 = vld [vmem:[%s0 + $0x60] sm:$0xff]
  %v27 = vld [vmem:[%s0 + $0x68] sm:$0xff]
  %v28 = vld [vmem:[%s0 + $0x70] sm:$0xff]
  %v29 = vld [vmem:[%s0 + $0x78] sm:$0xff]
  %v30 = vld [vmem:[%s1] sm:$0xff]
  %v31 = vld [vmem:[%s1 + $0x8] sm:$0xff]
  %v32 = vld [vmem:[%s1 + $0x10] sm:$0xff]
  %v33 = vld [vmem:[%s1 + $0x18] sm:$0xff]
  %v34 = vld [vmem:[%s1 + $0x20] sm:$0xff]
  %v35 = vld [vmem:[%s1 + $0x28] sm:$0xff]
  %v36 = vld [vmem:[%s1 + $0x30] sm:$0xff]
  %v37 = vld [vmem:[%s1 + $0x38] sm:$0xff]
  %v38 = vld [vmem:[%s1 + $0x40] sm:$0xff]
  %v39 = vld [vmem:[%s1 + $0x48] sm:$0xff]
  %v40 = vld [vmem:[%s1 + $0x50] sm:$0xff]
  %v41 = vld [vmem:[%s1 + $0x58] sm:$0xff]
  %v42 = vld [vmem:[%s1 + $0x60] sm:$0xff]
  %v43 = vld [vmem:[%s1 + $0x68] sm:$0xff]
  %v44 = vld [vmem:[%s1 + $0x70] sm:$0xff]
  %v45 = vld [vmem:[%s1 + $0x78] sm:$0xff]
  %v46 = vld [vmem:[%s2] sm:$0x1]
  %v48 = vlaneseq
  %v49 = vshrl.u32 %v48, 7
  %v50 = vsub.s32 0, %v49
  %v51 = vrot.slane %v46, %v50
  %53 = vmatprep.subr.mxu0 0.0
  %54 = vmatpush1.msra.mxu0 %v30
  %55 = vmatprep.subr.mxu0 0.0
  %56 = vmatpush1.msra.mxu0 %v31
  %57 = vmatprep.subr.mxu0 0.0
  %58 = vmatpush1.msra.mxu0 %v32
  %59 = vmatprep.subr.mxu0 0.0
  %60 = vmatpush1.msra.mxu0 %v33
  %61 = vmatprep.subr.mxu0 0.0
  %62 = vmatpush1.msra.mxu0 %v34
  %63 = vmatprep.subr.mxu0 0.0
  %64 = vmatpush1.msra.mxu0 %v35
  %65 = vmatprep.subr.mxu0 0.0
  %66 = vmatpush1.msra.mxu0 %v36
  %67 = vmatprep.subr.mxu0 0.0
  %68 = vmatpush1.msra.mxu0 %v37
  %69 = vmatprep.subr.mxu0 0.0
  %70 = vmatpush1.msra.mxu0 %v38
  %71 = vmatprep.subr.mxu0 0.0
  %72 = vmatpush1.msra.mxu0 %v39
  %73 = vmatprep.subr.mxu0 0.0
  %74 = vmatpush1.msra.mxu0 %v40
  %75 = vmatprep.subr.mxu0 0.0
  %76 = vmatpush1.msra.mxu0 %v41
  %77 = vmatprep.subr.mxu0 0.0
  %78 = vmatpush1.msra.mxu0 %v42
  %79 = vmatprep.subr.mxu0 0.0
  %80 = vmatpush1.msra.mxu0 %v43
  %81 = vmatprep.subr.mxu0 0.0
  %82 = vmatpush1.msra.mxu0 %v44
  %83 = vmatprep.subr.mxu0 0.0
  %84 = vmatpush1.msra.mxu0 %v45
  %85 = vmatprep.subr.mxu0 0.0
  %86 = vmatpush1.msra.mxu0 0.0
  %87 = vmatprep.subr.mxu0 0.0
  %88 = vmatpush1.msra.mxu0 0.0
  %89 = vmatprep.subr.mxu0 0.0
  %90 = vmatpush1.msra.mxu0 0.0
  %91 = vmatprep.subr.mxu0 0.0
  %92 = vmatpush1.msra.mxu0 0.0
  %93 = vmatprep.subr.mxu0 0.0
  %94 = vmatpush1.msra.mxu0 0.0
  %95 = vmatprep.subr.mxu0 0.0
  %96 = vmatpush1.msra.mxu0 0.0
  %97 = vmatprep.subr.mxu0 0.0
  %98 = vmatpush1.msra.mxu0 0.0
  %99 = vmatprep.subr.mxu0 0.0
  %100 = vmatpush1.msra.mxu0 0.0
  %101 = vmatprep.subr.mxu0 0.0
  %102 = vmatpush1.msra.mxu0 0.0
  %103 = vmatprep.subr.mxu0 0.0
  %104 = vmatpush1.msra.mxu0 0.0
  %105 = vmatprep.subr.mxu0 0.0
  %106 = vmatpush1.msra.mxu0 0.0
  %107 = vmatprep.subr.mxu0 0.0
  %108 = vmatpush1.msra.mxu0 0.0
  %109 = vmatprep.subr.mxu0 0.0
  %110 = vmatpush1.msra.mxu0 0.0
  %111 = vmatprep.subr.mxu0 0.0
  %112 = vmatpush1.msra.mxu0 0.0
  %113 = vmatprep.subr.mxu0 0.0
  %114 = vmatpush1.msra.mxu0 0.0
  %115 = vmatprep.subr.mxu0 0.0
  %116 = vmatpush1.msra.mxu0 0.0
  %117 = vmatprep.mubr.f32.mxu0 0.0
  %118 = vmatmul.mubr.f32.gmra.mrb[0].mxu0 %v14
  %v119 = vpop.f32.mrb[0].mxu0
  %v120 = vadd.f32 %v51, %v119
  %v121 = vpop.f32.mrb[0].mxu0
  %122 = vmatprep.mubr.f32.mxu0 0.0
  %123 = vmatmul.mubr.f32.gmra.mrb[0].mxu0 %v15
  %v124 = vpop.f32.mrb[0].mxu0
  %v125 = vadd.f32 %v51, %v124
  %v126 = vpop.f32.mrb[0].mxu0
  %127 = vmatprep.mubr.f32.mxu0 0.0
  %128 = vmatmul.mubr.f32.gmra.mrb[0].mxu0 %v16
  %v129 = vpop.f32.mrb[0].mxu0
  %v130 = vadd.f32 %v51, %v129
  %v131 = vpop.f32.mrb[0].mxu0
  %132 = vmatprep.mubr.f32.mxu0 0.0
  %133 = vmatmul.mubr.f32.gmra.mrb[0].mxu0 %v17
  %v134 = vpop.f32.mrb[0].mxu0
  %v135 = vadd.f32 %v51, %v134
  %v136 = vpop.f32.mrb[0].mxu0
  %137 = vmatprep.mubr.f32.mxu0 0.0
  %138 = vmatmul.mubr.f32.gmra.mrb[0].mxu0 %v18
  %v139 = vpop.f32.mrb[0].mxu0
  %v140 = vadd.f32 %v51, %v139
  %v141 = vpop.f32.mrb[0].mxu0
  %142 = vmatprep.mubr.f32.mxu0 0.0
  %143 = vmatmul.mubr.f32.gmra.mrb[0].mxu0 %v19
  %v144 = vpop.f32.mrb[0].mxu0
  %v145 = vadd.f32 %v51, %v144
  %v146 = vpop.f32.mrb[0].mxu0
  %147 = vmatprep.mubr.f32.mxu0 0.0
  %148 = vmatmul.mubr.f32.gmra.mrb[0].mxu0 %v20
  %v149 = vpop.f32.mrb[0].mxu0
  %v150 = vadd.f32 %v51, %v149
  %v151 = vpop.f32.mrb[0].mxu0
  %152 = vmatprep.mubr.f32.mxu0 0.0
  %153 = vmatmul.mubr.f32.gmra.mrb[0].mxu0 %v21
  %v154 = vpop.f32.mrb[0].mxu0
  %v155 = vadd.f32 %v51, %v154
  %v156 = vpop.f32.mrb[0].mxu0
  %157 = vmatprep.mubr.f32.mxu0 0.0
  %158 = vmatmul.mubr.f32.gmra.mrb[0].mxu0 %v22
  %v159 = vpop.f32.mrb[0].mxu0
  %v160 = vadd.f32 %v51, %v159
  %v161 = vpop.f32.mrb[0].mxu0
  %162 = vmatprep.mubr.f32.mxu0 0.0
  %163 = vmatmul.mubr.f32.gmra.mrb[0].mxu0 %v23
  %v164 = vpop.f32.mrb[0].mxu0
  %v165 = vadd.f32 %v51, %v164
  %v166 = vpop.f32.mrb[0].mxu0
  %167 = vmatprep.mubr.f32.mxu0 0.0
  %168 = vmatmul.mubr.f32.gmra.mrb[0].mxu0 %v24
  %v169 = vpop.f32.mrb[0].mxu0
  %v170 = vadd.f32 %v51, %v169
  %v171 = vpop.f32.mrb[0].mxu0
  %172 = vmatprep.mubr.f32.mxu0 0.0
  %173 = vmatmul.mubr.f32.gmra.mrb[0].mxu0 %v25
  %v174 = vpop.f32.mrb[0].mxu0
  %v175 = vadd.f32 %v51, %v174
  %v176 = vpop.f32.mrb[0].mxu0
  %177 = vmatprep.mubr.f32.mxu0 0.0
  %178 = vmatmul.mubr.f32.gmra.mrb[0].mxu0 %v26
  %v179 = vpop.f32.mrb[0].mxu0
  %v180 = vadd.f32 %v51, %v179
  %v181 = vpop.f32.mrb[0].mxu0
  %182 = vmatprep.mubr.f32.mxu0 0.0
  %183 = vmatmul.mubr.f32.gmra.mrb[0].mxu0 %v27
  %v184 = vpop.f32.mrb[0].mxu0
  %v185 = vadd.f32 %v51, %v184
  %v186 = vpop.f32.mrb[0].mxu0
  %187 = vmatprep.mubr.f32.mxu0 0.0
  %188 = vmatmul.mubr.f32.gmra.mrb[0].mxu0 %v28
  %v189 = vpop.f32.mrb[0].mxu0
  %v190 = vadd.f32 %v51, %v189
  %v191 = vpop.f32.mrb[0].mxu0
  %192 = vmatprep.mubr.f32.mxu0 0.0
  %193 = vmatmul.mubr.f32.gmra.mrb[0].mxu0 %v29
  %v194 = vpop.f32.mrb[0].mxu0
  %v195 = vadd.f32 %v51, %v194
  %v196 = vpop.f32.mrb[0].mxu0
  %197 = vdwg.mxu0
  %v198 = vmax.f32 %v120, 0.0
  %v199 = vmax.f32 %v125, 0.0
  %v200 = vmax.f32 %v130, 0.0
  %v201 = vmax.f32 %v135, 0.0
  %v202 = vmax.f32 %v140, 0.0
  %v203 = vmax.f32 %v145, 0.0
  %v204 = vmax.f32 %v150, 0.0
  %v205 = vmax.f32 %v155, 0.0
  %v206 = vmax.f32 %v160, 0.0
  %v207 = vmax.f32 %v165, 0.0
  %v208 = vmax.f32 %v170, 0.0
  %v209 = vmax.f32 %v175, 0.0
  %v210 = vmax.f32 %v180, 0.0
  %v211 = vmax.f32 %v185, 0.0
  %v212 = vmax.f32 %v190, 0.0
  %v213 = vmax.f32 %v195, 0.0
  %214 = vst [vmem:[%s3] sm:$0xff] %v198
  %215 = vst [vmem:[%s3 + $0x8] sm:$0xff] %v199
  %216 = vst [vmem:[%s3 + $0x10] sm:$0xff] %v200
  %217 = vst [vmem:[%s3 + $0x18] sm:$0xff] %v201
  %218 = vst [vmem:[%s3 + $0x20] sm:$0xff] %v202
  %219 = vst [vmem:[%s3 + $0x28] sm:$0xff] %v203
  %220 = vst [vmem:[%s3 + $0x30] sm:$0xff] %v204
  %221 = vst [vmem:[%s3 + $0x38] sm:$0xff] %v205
  %222 = vst [vmem:[%s3 + $0x40] sm:$0xff] %v206
  %223 = vst [vmem:[%s3 + $0x48] sm:$0xff] %v207
  %224 = vst [vmem:[%s3 + $0x50] sm:$0xff] %v208
  %225 = vst [vmem:[%s3 + $0x58] sm:$0xff] %v209
  %226 = vst [vmem:[%s3 + $0x60] sm:$0xff] %v210
  %227 = vst [vmem:[%s3 + $0x68] sm:$0xff] %v211
  %228 = vst [vmem:[%s3 + $0x70] sm:$0xff] %v212
  %229 = vst [vmem:[%s3 + $0x78] sm:$0xff] %v213
  // Predicated region
  $region14: #{graph_convolution.2} parent=0 // pred_check
    _
  $region15: #{graph_convolution.2} parent=0 // pred_check_branch
    %231 = sbr.rel (0) target = $region17
  $region16: #{graph_convolution.2} parent=0 // pred_region
    _
  $region17: #{graph_convolution.2} parent=0 // pred_fallthru
    _
  // Predicated region
  $region18: #{graph_convolution.2} parent=0 // pred_check
    _
  $region19: #{graph_convolution.2} parent=0 // pred_check_branch
    %233 = sbr.rel (0) target = $region21
  $region20: #{graph_convolution.2} parent=0 // pred_region
    _
  $region21: #{graph_convolution.2} parent=0 // pred_fallthru
    _

// kernel: graph_convolution.3
$region0: #{graph_convolution.3}
  #allocation0 [shape = 'u32[]', space=smem, size = 0x4, offset = 0x4, fixed_abs, tag = 'smem constant byte address 0x4 - core index']
  #allocation1 [shape = 'u32[144,128]{1,0:T(1,128)}', space=vmem, size = 0x12000, scoped, tag = 'internal scratch']
  #allocation2 [shape = 'f32[128,128]{1,0:T(8,128)}', space=vmem, size = 0x10000, scoped, tag = 'scratch operand']
  %s0 = inlined_call_operand.vmem [shape: f32[128,128], index: 0, kind: input, shape index: {}]
  %s1 = inlined_call_operand.vmem [shape: f32[128,128], index: 1, kind: input, shape index: {}]
  %s2 = inlined_call_operand.vmem [shape: f32[128,128], index: 2, kind: output, shape index: {}]
  %s3 = sld [smem:[#allocation0]]
  $region26: #{graph_convolution.3} parent=0
    _
  %s5 = ssub.s32 1, %s3
  %s6 = scalar_select 0, %s5, %s3
  // Predicated region
  $region2: #{graph_convolution.3} parent=0 // pred_check
    _
  $region3: #{graph_convolution.3} parent=0 // pred_check_branch
    %8 = sbr.rel (0) target = $region5
  $region4: #{graph_convolution.3} parent=0 // pred_region
    _
  $region5: #{graph_convolution.3} parent=0 // pred_fallthru
    _
  // Predicated region
  $region6: #{graph_convolution.3} parent=0 // pred_check
    _
  $region7: #{graph_convolution.3} parent=0 // pred_check_branch
    %10 = sbr.rel (0) target = $region9
  $region8: #{graph_convolution.3} parent=0 // pred_region
    _
  $region9: #{graph_convolution.3} parent=0 // pred_fallthru
    _
  %p11 = scmp.eq.s32.totalorder 0, 0
  // Predicated region
  $region10: #{graph_convolution.3} parent=0 // pred_check
    %p12 = pneg %p11
  $region11: #{graph_convolution.3} parent=0 // pred_check_branch
    %14 = sbr.rel (%p12) target = $region13
  $region12: #{graph_convolution.3} parent=0 // pred_region
    %15 = vst [vmem:[#allocation2] sm:$0xff] 0.0
    %16 = vst [vmem:[#allocation2 + $0x8] sm:$0xff] 0.0
    %17 = vst [vmem:[#allocation2 + $0x10] sm:$0xff] 0.0
    %18 = vst [vmem:[#allocation2 + $0x18] sm:$0xff] 0.0
    %19 = vst [vmem:[#allocation2 + $0x20] sm:$0xff] 0.0
    %20 = vst [vmem:[#allocation2 + $0x28] sm:$0xff] 0.0
    %21 = vst [vmem:[#allocation2 + $0x30] sm:$0xff] 0.0
    %22 = vst [vmem:[#allocation2 + $0x38] sm:$0xff] 0.0
    %23 = vst [vmem:[#allocation2 + $0x40] sm:$0xff] 0.0
    %24 = vst [vmem:[#allocation2 + $0x48] sm:$0xff] 0.0
    %25 = vst [vmem:[#allocation2 + $0x50] sm:$0xff] 0.0
    %26 = vst [vmem:[#allocation2 + $0x58] sm:$0xff] 0.0
    %27 = vst [vmem:[#allocation2 + $0x60] sm:$0xff] 0.0
    %28 = vst [vmem:[#allocation2 + $0x68] sm:$0xff] 0.0
    %29 = vst [vmem:[#allocation2 + $0x70] sm:$0xff] 0.0
    %30 = vst [vmem:[#allocation2 + $0x78] sm:$0xff] 0.0
  $region13: #{graph_convolution.3} parent=0 // pred_fallthru
    _
  %v31 = vld [vmem:[#allocation2] sm:$0xff]
  %v32 = vld [vmem:[#allocation2 + $0x8] sm:$0xff]
  %v33 = vld [vmem:[#allocation2 + $0x10] sm:$0xff]
  %v34 = vld [vmem:[#allocation2 + $0x18] sm:$0xff]
  %v35 = vld [vmem:[#allocation2 + $0x20] sm:$0xff]
  %v36 = vld [vmem:[#allocation2 + $0x28] sm:$0xff]
  %v37 = vld [vmem:[#allocation2 + $0x30] sm:$0xff]
  %v38 = vld [vmem:[#allocation2 + $0x38] sm:$0xff]
  %v39 = vld [vmem:[#allocation2 + $0x40] sm:$0xff]
  %v40 = vld [vmem:[#allocation2 + $0x48] sm:$0xff]
  %v41 = vld [vmem:[#allocation2 + $0x50] sm:$0xff]
  %v42 = vld [vmem:[#allocation2 + $0x58] sm:$0xff]
  %v43 = vld [vmem:[#allocation2 + $0x60] sm:$0xff]
  %v44 = vld [vmem:[#allocation2 + $0x68] sm:$0xff]
  %v45 = vld [vmem:[#allocation2 + $0x70] sm:$0xff]
  %v46 = vld [vmem:[#allocation2 + $0x78] sm:$0xff]
  %v47 = vld [vmem:[%s0] sm:$0xff]
  %v48 = vld [vmem:[%s0 + $0x8] sm:$0xff]
  %v49 = vld [vmem:[%s0 + $0x10] sm:$0xff]
  %v50 = vld [vmem:[%s0 + $0x18] sm:$0xff]
  %v51 = vld [vmem:[%s0 + $0x20] sm:$0xff]
  %v52 = vld [vmem:[%s0 + $0x28] sm:$0xff]
  %v53 = vld [vmem:[%s0 + $0x30] sm:$0xff]
  %v54 = vld [vmem:[%s0 + $0x38] sm:$0xff]
  %v55 = vld [vmem:[%s0 + $0x40] sm:$0xff]
  %v56 = vld [vmem:[%s0 + $0x48] sm:$0xff]
  %v57 = vld [vmem:[%s0 + $0x50] sm:$0xff]
  %v58 = vld [vmem:[%s0 + $0x58] sm:$0xff]
  %v59 = vld [vmem:[%s0 + $0x60] sm:$0xff]
  %v60 = vld [vmem:[%s0 + $0x68] sm:$0xff]
  %v61 = vld [vmem:[%s0 + $0x70] sm:$0xff]
  %v62 = vld [vmem:[%s0 + $0x78] sm:$0xff]
  %v63 = vld [vmem:[%s1] sm:$0xff]
  %v64 = vld [vmem:[%s1 + $0x8] sm:$0xff]
  %v65 = vld [vmem:[%s1 + $0x10] sm:$0xff]
  %v66 = vld [vmem:[%s1 + $0x18] sm:$0xff]
  %v67 = vld [vmem:[%s1 + $0x20] sm:$0xff]
  %v68 = vld [vmem:[%s1 + $0x28] sm:$0xff]
  %v69 = vld [vmem:[%s1 + $0x30] sm:$0xff]
  %v70 = vld [vmem:[%s1 + $0x38] sm:$0xff]
  %v71 = vld [vmem:[%s1 + $0x40] sm:$0xff]
  %v72 = vld [vmem:[%s1 + $0x48] sm:$0xff]
  %v73 = vld [vmem:[%s1 + $0x50] sm:$0xff]
  %v74 = vld [vmem:[%s1 + $0x58] sm:$0xff]
  %v75 = vld [vmem:[%s1 + $0x60] sm:$0xff]
  %v76 = vld [vmem:[%s1 + $0x68] sm:$0xff]
  %v77 = vld [vmem:[%s1 + $0x70] sm:$0xff]
  %v78 = vld [vmem:[%s1 + $0x78] sm:$0xff]
  %79 = vmatprep.subr.mxu0 0.0
  %80 = vmatpush1.msra.mxu0 %v63
  %81 = vmatprep.subr.mxu0 0.0
  %82 = vmatpush1.msra.mxu0 %v64
  %83 = vmatprep.subr.mxu0 0.0
  %84 = vmatpush1.msra.mxu0 %v65
  %85 = vmatprep.subr.mxu0 0.0
  %86 = vmatpush1.msra.mxu0 %v66
  %87 = vmatprep.subr.mxu0 0.0
  %88 = vmatpush1.msra.mxu0 %v67
  %89 = vmatprep.subr.mxu0 0.0
  %90 = vmatpush1.msra.mxu0 %v68
  %91 = vmatprep.subr.mxu0 0.0
  %92 = vmatpush1.msra.mxu0 %v69
  %93 = vmatprep.subr.mxu0 0.0
  %94 = vmatpush1.msra.mxu0 %v70
  %95 = vmatprep.subr.mxu0 0.0
  %96 = vmatpush1.msra.mxu0 %v71
  %97 = vmatprep.subr.mxu0 0.0
  %98 = vmatpush1.msra.mxu0 %v72
  %99 = vmatprep.subr.mxu0 0.0
  %100 = vmatpush1.msra.mxu0 %v73
  %101 = vmatprep.subr.mxu0 0.0
  %102 = vmatpush1.msra.mxu0 %v74
  %103 = vmatprep.subr.mxu0 0.0
  %104 = vmatpush1.msra.mxu0 %v75
  %105 = vmatprep.subr.mxu0 0.0
  %106 = vmatpush1.msra.mxu0 %v76
  %107 = vmatprep.subr.mxu0 0.0
  %108 = vmatpush1.msra.mxu0 %v77
  %109 = vmatprep.subr.mxu0 0.0
  %110 = vmatpush1.msra.mxu0 %v78
  %111 = vmatprep.subr.mxu0 0.0
  %112 = vmatpush1.msra.mxu0 0.0
  %113 = vmatprep.subr.mxu0 0.0
  %114 = vmatpush1.msra.mxu0 0.0
  %115 = vmatprep.subr.mxu0 0.0
  %116 = vmatpush1.msra.mxu0 0.0
  %117 = vmatprep.subr.mxu0 0.0
  %118 = vmatpush1.msra.mxu0 0.0
  %119 = vmatprep.subr.mxu0 0.0
  %120 = vmatpush1.msra.mxu0 0.0
  %121 = vmatprep.subr.mxu0 0.0
  %122 = vmatpush1.msra.mxu0 0.0
  %123 = vmatprep.subr.mxu0 0.0
  %124 = vmatpush1.msra.mxu0 0.0
  %125 = vmatprep.subr.mxu0 0.0
  %126 = vmatpush1.msra.mxu0 0.0
  %127 = vmatprep.subr.mxu0 0.0
  %128 = vmatpush1.msra.mxu0 0.0
  %129 = vmatprep.subr.mxu0 0.0
  %130 = vmatpush1.msra.mxu0 0.0
  %131 = vmatprep.subr.mxu0 0.0
  %132 = vmatpush1.msra.mxu0 0.0
  %133 = vmatprep.subr.mxu0 0.0
  %134 = vmatpush1.msra.mxu0 0.0
  %135 = vmatprep.subr.mxu0 0.0
  %136 = vmatpush1.msra.mxu0 0.0
  %137 = vmatprep.subr.mxu0 0.0
  %138 = vmatpush1.msra.mxu0 0.0
  %139 = vmatprep.subr.mxu0 0.0
  %140 = vmatpush1.msra.mxu0 0.0
  %141 = vmatprep.subr.mxu0 0.0
  %142 = vmatpush1.msra.mxu0 0.0
  %143 = vmatprep.mubr.f32.mxu0 0.0
  %144 = vmatmul.mubr.f32.gmra.mrb[0].mxu0 %v47
  %v145 = vpop.f32.mrb[0].mxu0
  %v146 = vadd.f32 0.0, %v145
  %v147 = vpop.f32.mrb[0].mxu0
  %148 = vmatprep.mubr.f32.mxu0 0.0
  %149 = vmatmul.mubr.f32.gmra.mrb[0].mxu0 %v48
  %v150 = vpop.f32.mrb[0].mxu0
  %v151 = vadd.f32 0.0, %v150
  %v152 = vpop.f32.mrb[0].mxu0
  %153 = vmatprep.mubr.f32.mxu0 0.0
  %154 = vmatmul.mubr.f32.gmra.mrb[0].mxu0 %v49
  %v155 = vpop.f32.mrb[0].mxu0
  %v156 = vadd.f32 0.0, %v155
  %v157 = vpop.f32.mrb[0].mxu0
  %158 = vmatprep.mubr.f32.mxu0 0.0
  %159 = vmatmul.mubr.f32.gmra.mrb[0].mxu0 %v50
  %v160 = vpop.f32.mrb[0].mxu0
  %v161 = vadd.f32 0.0, %v160
  %v162 = vpop.f32.mrb[0].mxu0
  %163 = vmatprep.mubr.f32.mxu0 0.0
  %164 = vmatmul.mubr.f32.gmra.mrb[0].mxu0 %v51
  %v165 = vpop.f32.mrb[0].mxu0
  %v166 = vadd.f32 0.0, %v165
  %v167 = vpop.f32.mrb[0].mxu0
  %168 = vmatprep.mubr.f32.mxu0 0.0
  %169 = vmatmul.mubr.f32.gmra.mrb[0].mxu0 %v52
  %v170 = vpop.f32.mrb[0].mxu0
  %v171 = vadd.f32 0.0, %v170
  %v172 = vpop.f32.mrb[0].mxu0
  %173 = vmatprep.mubr.f32.mxu0 0.0
  %174 = vmatmul.mubr.f32.gmra.mrb[0].mxu0 %v53
  %v175 = vpop.f32.mrb[0].mxu0
  %v176 = vadd.f32 0.0, %v175
  %v177 = vpop.f32.mrb[0].mxu0
  %178 = vmatprep.mubr.f32.mxu0 0.0
  %179 = vmatmul.mubr.f32.gmra.mrb[0].mxu0 %v54
  %v180 = vpop.f32.mrb[0].mxu0
  %v181 = vadd.f32 0.0, %v180
  %v182 = vpop.f32.mrb[0].mxu0
  %183 = vmatprep.mubr.f32.mxu0 0.0
  %184 = vmatmul.mubr.f32.gmra.mrb[0].mxu0 %v55
  %v185 = vpop.f32.mrb[0].mxu0
  %v186 = vadd.f32 0.0, %v185
  %v187 = vpop.f32.mrb[0].mxu0
  %188 = vmatprep.mubr.f32.mxu0 0.0
  %189 = vmatmul.mubr.f32.gmra.mrb[0].mxu0 %v56
  %v190 = vpop.f32.mrb[0].mxu0
  %v191 = vadd.f32 0.0, %v190
  %v192 = vpop.f32.mrb[0].mxu0
  %193 = vmatprep.mubr.f32.mxu0 0.0
  %194 = vmatmul.mubr.f32.gmra.mrb[0].mxu0 %v57
  %v195 = vpop.f32.mrb[0].mxu0
  %v196 = vadd.f32 0.0, %v195
  %v197 = vpop.f32.mrb[0].mxu0
  %198 = vmatprep.mubr.f32.mxu0 0.0
  %199 = vmatmul.mubr.f32.gmra.mrb[0].mxu0 %v58
  %v200 = vpop.f32.mrb[0].mxu0
  %v201 = vadd.f32 0.0, %v200
  %v202 = vpop.f32.mrb[0].mxu0
  %203 = vmatprep.mubr.f32.mxu0 0.0
  %204 = vmatmul.mubr.f32.gmra.mrb[0].mxu0 %v59
  %v205 = vpop.f32.mrb[0].mxu0
  %v206 = vadd.f32 0.0, %v205
  %v207 = vpop.f32.mrb[0].mxu0
  %208 = vmatprep.mubr.f32.mxu0 0.0
  %209 = vmatmul.mubr.f32.gmra.mrb[0].mxu0 %v60
  %v210 = vpop.f32.mrb[0].mxu0
  %v211 = vadd.f32 0.0, %v210
  %v212 = vpop.f32.mrb[0].mxu0
  %213 = vmatprep.mubr.f32.mxu0 0.0
  %214 = vmatmul.mubr.f32.gmra.mrb[0].mxu0 %v61
  %v215 = vpop.f32.mrb[0].mxu0
  %v216 = vadd.f32 0.0, %v215
  %v217 = vpop.f32.mrb[0].mxu0
  %218 = vmatprep.mubr.f32.mxu0 0.0
  %219 = vmatmul.mubr.f32.gmra.mrb[0].mxu0 %v62
  %v220 = vpop.f32.mrb[0].mxu0
  %v221 = vadd.f32 0.0, %v220
  %v222 = vpop.f32.mrb[0].mxu0
  %223 = vdwg.mxu0
  %v224 = vadd.f32 %v31, %v146
  %v225 = vadd.f32 %v32, %v151
  %v226 = vadd.f32 %v33, %v156
  %v227 = vadd.f32 %v34, %v161
  %v228 = vadd.f32 %v35, %v166
  %v229 = vadd.f32 %v36, %v171
  %v230 = vadd.f32 %v37, %v176
  %v231 = vadd.f32 %v38, %v181
  %v232 = vadd.f32 %v39, %v186
  %v233 = vadd.f32 %v40, %v191
  %v234 = vadd.f32 %v41, %v196
  %v235 = vadd.f32 %v42, %v201
  %v236 = vadd.f32 %v43, %v206
  %v237 = vadd.f32 %v44, %v211
  %v238 = vadd.f32 %v45, %v216
  %v239 = vadd.f32 %v46, %v221
  %240 = vst [vmem:[#allocation2] sm:$0xff] %v224
  %241 = vst [vmem:[#allocation2 + $0x8] sm:$0xff] %v225
  %242 = vst [vmem:[#allocation2 + $0x10] sm:$0xff] %v226
  %243 = vst [vmem:[#allocation2 + $0x18] sm:$0xff] %v227
  %244 = vst [vmem:[#allocation2 + $0x20] sm:$0xff] %v228
  %245 = vst [vmem:[#allocation2 + $0x28] sm:$0xff] %v229
  %246 = vst [vmem:[#allocation2 + $0x30] sm:$0xff] %v230
  %247 = vst [vmem:[#allocation2 + $0x38] sm:$0xff] %v231
  %248 = vst [vmem:[#allocation2 + $0x40] sm:$0xff] %v232
  %249 = vst [vmem:[#allocation2 + $0x48] sm:$0xff] %v233
  %250 = vst [vmem:[#allocation2 + $0x50] sm:$0xff] %v234
  %251 = vst [vmem:[#allocation2 + $0x58] sm:$0xff] %v235
  %252 = vst [vmem:[#allocation2 + $0x60] sm:$0xff] %v236
  %253 = vst [vmem:[#allocation2 + $0x68] sm:$0xff] %v237
  %254 = vst [vmem:[#allocation2 + $0x70] sm:$0xff] %v238
  %255 = vst [vmem:[#allocation2 + $0x78] sm:$0xff] %v239
  // Predicated region
  $region14: #{graph_convolution.3} parent=0 // pred_check
    %p256 = pneg %p11
  $region15: #{graph_convolution.3} parent=0 // pred_check_branch
    %258 = sbr.rel (%p256) target = $region17
  $region16: #{graph_convolution.3} parent=0 // pred_region
    %v259 = vld [vmem:[#allocation2] sm:$0xff]
    %v260 = vld [vmem:[#allocation2 + $0x8] sm:$0xff]
    %v261 = vld [vmem:[#allocation2 + $0x10] sm:$0xff]
    %v262 = vld [vmem:[#allocation2 + $0x18] sm:$0xff]
    %v263 = vld [vmem:[#allocation2 + $0x20] sm:$0xff]
    %v264 = vld [vmem:[#allocation2 + $0x28] sm:$0xff]
    %v265 = vld [vmem:[#allocation2 + $0x30] sm:$0xff]
    %v266 = vld [vmem:[#allocation2 + $0x38] sm:$0xff]
    %v267 = vld [vmem:[#allocation2 + $0x40] sm:$0xff]
    %v268 = vld [vmem:[#allocation2 + $0x48] sm:$0xff]
    %v269 = vld [vmem:[#allocation2 + $0x50] sm:$0xff]
    %v270 = vld [vmem:[#allocation2 + $0x58] sm:$0xff]
    %v271 = vld [vmem:[#allocation2 + $0x60] sm:$0xff]
    %v272 = vld [vmem:[#allocation2 + $0x68] sm:$0xff]
    %v273 = vld [vmem:[#allocation2 + $0x70] sm:$0xff]
    %v274 = vld [vmem:[#allocation2 + $0x78] sm:$0xff]
    %275 = vst [vmem:[%s2] sm:$0xff] %v259
    %276 = vst [vmem:[%s2 + $0x8] sm:$0xff] %v260
    %277 = vst [vmem:[%s2 + $0x10] sm:$0xff] %v261
    %278 = vst [vmem:[%s2 + $0x18] sm:$0xff] %v262
    %279 = vst [vmem:[%s2 + $0x20] sm:$0xff] %v263
    %280 = vst [vmem:[%s2 + $0x28] sm:$0xff] %v264
    %281 = vst [vmem:[%s2 + $0x30] sm:$0xff] %v265
    %282 = vst [vmem:[%s2 + $0x38] sm:$0xff] %v266
    %283 = vst [vmem:[%s2 + $0x40] sm:$0xff] %v267
    %284 = vst [vmem:[%s2 + $0x48] sm:$0xff] %v268
    %285 = vst [vmem:[%s2 + $0x50] sm:$0xff] %v269
    %286 = vst [vmem:[%s2 + $0x58] sm:$0xff] %v270
    %287 = vst [vmem:[%s2 + $0x60] sm:$0xff] %v271
    %288 = vst [vmem:[%s2 + $0x68] sm:$0xff] %v272
    %289 = vst [vmem:[%s2 + $0x70] sm:$0xff] %v273
    %290 = vst [vmem:[%s2 + $0x78] sm:$0xff] %v274
  $region17: #{graph_convolution.3} parent=0 // pred_fallthru
    _
  // Predicated region
  $region18: #{graph_convolution.3} parent=0 // pred_check
    _
  $region19: #{graph_convolution.3} parent=0 // pred_check_branch
    %292 = sbr.rel (0) target = $region21
  $region20: #{graph_convolution.3} parent=0 // pred_region
    _
  $region21: #{graph_convolution.3} parent=0 // pred_fallthru
    _
  // Predicated region
  $region22: #{graph_convolution.3} parent=0 // pred_check
    _
  $region23: #{graph_convolution.3} parent=0 // pred_check_branch
    %294 = sbr.rel (0) target = $region25
  $region24: #{graph_convolution.3} parent=0 // pred_region
    _
  $region25: #{graph_convolution.3} parent=0 // pred_fallthru
    _

</llo_original>
